<compile_context>
chip_gen: v7x
topology: tpu7x:2x2x1
jax: 0.10.0
libtpu: 0.0.40
codegen_flags: <defaults>
</compile_context>

<pallas_src>
import functools

import jax
import jax.numpy as jnp
from jax import lax
from jax.experimental import pallas as pl
from jax.experimental.pallas import tpu as pltpu

LANE = 128  # TPU lane width: last dim of every VMEM block is a multiple of this.


def _round_up(n, m):
    return (n + m - 1) // m * m


def _num_tensorcores():
    """Best-effort TC count per device (v7x has 2; v5e/v6e have 1)."""
    try:
        return max(1, int(getattr(jax.devices()[0], "num_cores", 1) or 1))
    except Exception:  # pragma: no cover - defensive
        return 1


def _choose_batch_tile(B, requested=512):
    """Pick a lane-friendly batch tile (multiple of 128), clamped to the
    padded batch; on multi-TC chips keep >=1 grid step per TensorCore."""
    tile = max(LANE, (int(requested) // LANE) * LANE)
    tile = min(tile, _round_up(B, LANE))
    ncores = _num_tensorcores()
    while tile > LANE and _round_up(B, tile) // tile < ncores:
        tile = max(LANE, ((tile // 2) // LANE) * LANE)
    return tile


# ---------------------------------------------------------------------------
# Shared in-kernel MLP body (one ode_net evaluation on VMEM-resident values).
# bf16 matmul inputs + f32 accumulation; bias add / tanh in f32 (v5e-safe).
# ---------------------------------------------------------------------------
def _mlp(x_f32, w1_bf16, b1_f32, w2_bf16, b2_f32):
    h = jnp.dot(x_f32.astype(jnp.bfloat16), w1_bf16,
                preferred_element_type=jnp.float32) + b1_f32
    h = jnp.tanh(h)
    y = jnp.dot(h.astype(jnp.bfloat16), w2_bf16,
                preferred_element_type=jnp.float32) + b2_f32
    return y


# ---------------------------------------------------------------------------
# Kernel 1: single ODEFunc.forward evaluation (module-faithful semantics).
# ---------------------------------------------------------------------------
def _ode_net_kernel(x_ref, w1_ref, b1_ref, w2_ref, b2_ref, o_ref):
    y = _mlp(x_ref[...].astype(jnp.float32),
             w1_ref[...], b1_ref[...], w2_ref[...], b2_ref[...])
    o_ref[...] = y.astype(o_ref.dtype)


# ---------------------------------------------------------------------------
# Kernel 2: fused fixed-step integrator (Euler or RK4); whole time loop runs
# inside one pallas_call.  Weights/biases are re-read from VMEM per eval.
# ---------------------------------------------------------------------------
def _integrator_kernel(x0_ref, w1_ref, b1_ref, w2_ref, b2_ref, o_ref,
                       *, n_steps, dt, method):
    def f(x_f32):
        # Re-read params from VMEM each evaluation (vld is nearly free) rather
        # than pinning them in vregs across the unrolled loop -> no spills.
        return _mlp(x_f32, w1_ref[...], b1_ref[...], w2_ref[...], b2_ref[...])

    x = x0_ref[...].astype(jnp.float32)

    if method == "euler":
        def body(_, x):
            return x + dt * f(x)
    elif method == "rk4":
        def body(_, x):
            k1 = f(x)
            k2 = f(x + (0.5 * dt) * k1)
            k3 = f(x + (0.5 * dt) * k2)
            k4 = f(x + dt * k3)
            return x + (dt / 6.0) * (k1 + 2.0 * (k2 + k3) + k4)
    else:
        raise ValueError(f"unknown method: {method}")

    unroll = max(1, min(2, int(n_steps)))  # cap unroll to keep vreg pressure low
    x = lax.fori_loop(0, n_steps, body, x, unroll=unroll)
    o_ref[...] = x.astype(o_ref.dtype)


# ---------------------------------------------------------------------------
# Specs / padding helpers
# ---------------------------------------------------------------------------
def _common_specs(batch_tile, Dp, Hp):
    in_specs = [
        pl.BlockSpec((batch_tile, Dp), lambda i: (i, 0)),   # x tile
        pl.BlockSpec((Dp, Hp), lambda i: (0, 0)),           # W1 (VMEM-resident)
        pl.BlockSpec((1, Hp), lambda i: (0, 0)),            # b1
        pl.BlockSpec((Hp, Dp), lambda i: (0, 0)),           # W2
        pl.BlockSpec((1, Dp), lambda i: (0, 0)),            # b2
    ]
    out_specs = pl.BlockSpec((batch_tile, Dp), lambda i: (i, 0))
    return in_specs, out_specs


def pad_state(x, batch_tile, Dp):
    """Zero-pad (B, D) -> (Bp, Dp). Do this ONCE before a solver loop."""
    B, D = x.shape
    Bp = _round_up(B, batch_tile)
    return jnp.zeros((Bp, Dp), x.dtype).at[:B, :D].set(x)


def unpad_state(xp, B, D):
    """Slice padded state back to (B, D). Do this ONCE after the solver loop."""
    return xp[:B, :D]


def _param_bytes(Dp, Hp):
    return 2 * Dp * Hp * 2 + (Hp + Dp) * 4  # bf16 weights + f32 biases


# ---------------------------------------------------------------------------
# Wrappers
# ---------------------------------------------------------------------------
def ode_net_pallas_padded(xp, packed_params, *, batch_tile):
    """One ode_net(x) evaluation on an ALREADY padded (Bp, Dp) state.

    No pad/slice inside: intended to be driven by an external solver that
    keeps its state in padded layout (pad once, slice once at the end)."""
    w1, b1, w2, b2 = packed_params
    Bp, Dp = xp.shape
    _, Hp = w1.shape
    assert Bp % batch_tile == 0 and Dp == w1.shape[0]

    in_specs, out_specs = _common_specs(batch_tile, Dp, Hp)
    cost = pl.CostEstimate(
        flops=2 * Bp * (Dp * Hp + Hp * Dp),
        transcendentals=Bp * Hp,
        bytes_accessed=2 * Bp * Dp * 4 + _param_bytes(Dp, Hp),
    )
    return pl.pallas_call(
        _ode_net_kernel,
        out_shape=jax.ShapeDtypeStruct((Bp, Dp), xp.dtype),
        grid=(Bp // batch_tile,),
        in_specs=in_specs,
        out_specs=out_specs,
        compiler_params=pltpu.CompilerParams(
            dimension_semantics=("parallel",)),
        cost_estimate=cost,
    )(xp, w1, b1, w2, b2)


def ode_net_pallas(x, packed_params, *, batch_tile=None):
    """Module-faithful single evaluation on an unpadded (B, D) input."""
    w1, _, _, _ = packed_params
    B, D = x.shape
    Dp, _ = w1.shape
    tile = _choose_batch_tile(B, 512 if batch_tile is None else batch_tile)
    xp = pad_state(x, tile, Dp)
    out = ode_net_pallas_padded(xp, packed_params, batch_tile=tile)
    return unpad_state(out, B, D)


def ode_func(t, x, packed_params, *, batch_tile=None):
    """ODEFunc.forward: ignores t, applies ode_net(x)."""
    del t  # ODEFunc discards the time argument
    return ode_net_pallas(x, packed_params, batch_tile=batch_tile)


def integrate_fixed_step_pallas(x0, packed_params, *, n_steps, dt,
                                method="euler", batch_tile=None):
    """Fixed-step integration of dx/dt = ode_net(x), fused in ONE kernel.

    method: "euler" (1 eval/step) or "rk4" (4 evals/step)."""
    w1, b1, w2, b2 = packed_params
    B, D = x0.shape
    Dp, Hp = w1.shape
    tile = _choose_batch_tile(B, 512 if batch_tile is None else batch_tile)
    xp = pad_state(x0, tile, Dp)
    Bp = xp.shape[0]

    in_specs, out_specs = _common_specs(tile, Dp, Hp)
    evals = n_steps * (4 if method == "rk4" else 1)
    cost = pl.CostEstimate(
        flops=2 * evals * Bp * (Dp * Hp + Hp * Dp),
        transcendentals=evals * Bp * Hp,
        bytes_accessed=2 * Bp * Dp * 4 + _param_bytes(Dp, Hp),
    )
    kernel = functools.partial(_integrator_kernel, n_steps=int(n_steps),
                               dt=float(dt), method=method)
    out = pl.pallas_call(
        kernel,
        out_shape=jax.ShapeDtypeStruct((Bp, Dp), x0.dtype),
        grid=(Bp // tile,),
        in_specs=in_specs,
        out_specs=out_specs,
        compiler_params=pltpu.CompilerParams(
            dimension_semantics=("parallel",)),
        cost_estimate=cost,
    )(xp, w1, b1, w2, b2)
    return unpad_state(out, B, D)


# ---------------------------------------------------------------------------
# Parameter init / packing
# ---------------------------------------------------------------------------
def init_ode_net_params(key, in_dim, hidden_dim):
    """Deterministic synthetic parameter init (Linear-layer shapes, f32)."""
    k1, k2, k3, k4 = jax.random.split(key, 4)
    s1 = 1.0 / jnp.sqrt(in_dim)
    s2 = 1.0 / jnp.sqrt(hidden_dim)
    w1 = jax.random.uniform(k1, (in_dim, hidden_dim), jnp.float32, -s1, s1)
    b1 = jax.random.uniform(k2, (hidden_dim,), jnp.float32, -s1, s1)
    w2 = jax.random.uniform(k3, (hidden_dim, in_dim), jnp.float32, -s2, s2)
    b2 = jax.random.uniform(k4, (in_dim,), jnp.float32, -s2, s2)
    return w1, b1, w2, b2


def pack_params_for_tpu(w1, b1, w2, b2, lane=LANE):
    """Zero-pad feature dims to multiples of 128 (lane-dense), bf16 weights.

    Padded weight columns/rows and biases are ZERO so padded lanes never leak
    into real outputs (tanh(0)=0 keeps layer-1 padding inert; padded layer-2
    output columns are zero, so padded D-lanes of the state stay zero)."""
    D, H = w1.shape
    Dp, Hp = _round_up(D, lane), _round_up(H, lane)
    w1p = jnp.zeros((Dp, Hp), jnp.bfloat16).at[:D, :H].set(w1.astype(jnp.bfloat16))
    b1p = jnp.zeros((1, Hp), jnp.float32).at[0, :H].set(b1)
    w2p = jnp.zeros((Hp, Dp), jnp.bfloat16).at[:H, :D].set(w2.astype(jnp.bfloat16))
    b2p = jnp.zeros((1, Dp), jnp.float32).at[0, :D].set(b2)
    return w1p, b1p, w2p, b2p


# ---------------------------------------------------------------------------
# Pure-JAX references (same bf16 rounding as the kernel)
# ---------------------------------------------------------------------------
def ode_net_ref(x, w1, b1, w2, b2):
    h = jnp.dot(x.astype(jnp.bfloat16), w1.astype(jnp.bfloat16),
                preferred_element_type=jnp.float32) + b1
    h = jnp.tanh(h)
    return jnp.dot(h.astype(jnp.bfloat16), w2.astype(jnp.bfloat16),
                   preferred_element_type=jnp.float32) + b2


def euler_ref(x0, params, n_steps, dt):
    x = x0
    for _ in range(n_steps):
        x = x + dt * ode_net_ref(x, *params)
    return x


def rk4_ref(x0, params, n_steps, dt):
    x = x0
    for _ in range(n_steps):
        k1 = ode_net_ref(x, *params)
        k2 = ode_net_ref(x + 0.5 * dt * k1, *params)
        k3 = ode_net_ref(x + 0.5 * dt * k2, *params)
        k4 = ode_net_ref(x + dt * k3, *params)
        x = x + (dt / 6.0) * (k1 + 2.0 * (k2 + k3) + k4)
    return x


if __name__ == "__main__":
    # Latent-state batch (many particles/time points), latent dim, MLP hidden.
    B, D, H = 256, 32, 64
    N_STEPS, DT = 8, 0.05

    key = jax.random.PRNGKey(0)
    kx, kp = jax.random.split(key)
    x = jax.random.normal(kx, (B, D), jnp.float32)
    raw_params = init_ode_net_params(kp, D, H)
    packed = pack_params_for_tpu(*raw_params)
    t = jnp.float32(0.3)  # ignored, as in ODEFunc.forward

    # 1) Module-faithful forward pass.
    y = ode_func(t, x, packed)
    y = jax.block_until_ready(y)
    y_ref = ode_net_ref(x, *raw_params)
    assert y.shape == (B, D)
    assert jnp.allclose(y, y_ref, atol=2e-3, rtol=2e-3), float(
        jnp.max(jnp.abs(y - y_ref)))

    # 2) External-solver style loop: pad ONCE, evaluate on padded state each
    #    step (no per-step pad/slice), slice ONCE at the end.
    Dp = packed[0].shape[0]
    tile = _choose_batch_tile(B, 512)
    xp = pad_state(x, tile, Dp)
    for _ in range(N_STEPS):
        xp = xp + DT * ode_net_pallas_padded(xp, packed, batch_tile=tile)
    x_ext = jax.block_until_ready(unpad_state(xp, B, D))
    x_ext_ref = euler_ref(x, raw_params, N_STEPS, DT)
    assert jnp.allclose(x_ext, x_ext_ref, atol=5e-3, rtol=5e-3), float(
        jnp.max(jnp.abs(x_ext - x_ext_ref)))

    # 3) Fused Euler integration (whole time loop inside one pallas_call).
    xT = integrate_fixed_step_pallas(x, packed, n_steps=N_STEPS, dt=DT,
                                     method="euler")
    xT = jax.block_until_ready(xT)
    assert xT.shape == (B, D)
    assert jnp.allclose(xT, x_ext_ref, atol=5e-3, rtol=5e-3), float(
        jnp.max(jnp.abs(xT - x_ext_ref)))

    # 4) Fused RK4 integration (4 ode_net evals per step, still one launch).
    xT4 = integrate_fixed_step_pallas(x, packed, n_steps=N_STEPS, dt=DT,
                                      method="rk4")
    xT4 = jax.block_until_ready(xT4)
    xT4_ref = rk4_ref(x, raw_params, N_STEPS, DT)
    assert jnp.allclose(xT4, xT4_ref, atol=5e-3, rtol=5e-3), float(
        jnp.max(jnp.abs(xT4 - xT4_ref)))

    print("KERNEL_OK")
</pallas_src>

<mosaic_0001>
module attributes {stable_mosaic.version = 11 : i64} {
  func.func @_ode_net_kernel(%arg0: i32, %arg1: memref<256x128xf32, #tpu.memory_space<vmem>>, %arg2: memref<128x128xbf16, #tpu.memory_space<vmem>>, %arg3: memref<1x128xf32, #tpu.memory_space<vmem>>, %arg4: memref<128x128xbf16, #tpu.memory_space<vmem>>, %arg5: memref<1x128xf32, #tpu.memory_space<vmem>>, %arg6: memref<256x128xf32, #tpu.memory_space<vmem>>) attributes {dimension_semantics = [#tpu.dimension_semantics<parallel>], iteration_bounds = array<i64: 1>, scalar_prefetch = 0 : i64, scratch_operands = 0 : i64, tpu.core_type = #tpu.core_type<tc>, window_params = [{transform_indices = @transform_0, window_bounds = array<i64: 256, 128>}, {pipeline_mode = #tpu.pipeline_mode<synchronous>, transform_indices = @transform_1, window_bounds = array<i64: 128, 128>}, {pipeline_mode = #tpu.pipeline_mode<synchronous>, transform_indices = @transform_2, window_bounds = array<i64: 1, 128>}, {pipeline_mode = #tpu.pipeline_mode<synchronous>, transform_indices = @transform_3, window_bounds = array<i64: 128, 128>}, {pipeline_mode = #tpu.pipeline_mode<synchronous>, transform_indices = @transform_4, window_bounds = array<i64: 1, 128>}, {transform_indices = @transform_5, window_bounds = array<i64: 256, 128>}]} {
    %c0 = arith.constant 0 : index
    %c0_0 = arith.constant 0 : index
    %0 = vector.load %arg1[%c0, %c0_0] : memref<256x128xf32, #tpu.memory_space<vmem>>, vector<256x128xf32>
    %c0_1 = arith.constant 0 : index
    %c0_2 = arith.constant 0 : index
    %1 = vector.load %arg2[%c0_1, %c0_2] : memref<128x128xbf16, #tpu.memory_space<vmem>>, vector<128x128xbf16>
    %c0_3 = arith.constant 0 : index
    %c0_4 = arith.constant 0 : index
    %2 = vector.load %arg3[%c0_3, %c0_4] : memref<1x128xf32, #tpu.memory_space<vmem>>, vector<1x128xf32>
    %c0_5 = arith.constant 0 : index
    %c0_6 = arith.constant 0 : index
    %3 = vector.load %arg4[%c0_5, %c0_6] : memref<128x128xbf16, #tpu.memory_space<vmem>>, vector<128x128xbf16>
    %c0_7 = arith.constant 0 : index
    %c0_8 = arith.constant 0 : index
    %4 = vector.load %arg5[%c0_7, %c0_8] : memref<1x128xf32, #tpu.memory_space<vmem>>, vector<1x128xf32>
    %5 = arith.truncf %0 : vector<256x128xf32> to vector<256x128xbf16>
    %cst = arith.constant dense<0.000000e+00> : vector<256x128xf32>
    %6 = tpu.matmul %5, %1, %cst {dimension_numbers = #tpu.dot_dimension_numbers<[1], [0], [0], [1], [0, 0, 1, 1], [], []>} : vector<256x128xbf16>, vector<128x128xbf16>, vector<256x128xf32> -> vector<256x128xf32>
    %7 = vector.broadcast %2 : vector<1x128xf32> to vector<256x128xf32>
    %8 = arith.addf %6, %7 : vector<256x128xf32>
    %9 = math.tanh %8 : vector<256x128xf32>
    %10 = arith.truncf %9 : vector<256x128xf32> to vector<256x128xbf16>
    %cst_9 = arith.constant dense<0.000000e+00> : vector<256x128xf32>
    %11 = tpu.matmul %10, %3, %cst_9 {dimension_numbers = #tpu.dot_dimension_numbers<[1], [0], [0], [1], [0, 0, 1, 1], [], []>} : vector<256x128xbf16>, vector<128x128xbf16>, vector<256x128xf32> -> vector<256x128xf32>
    %12 = vector.broadcast %4 : vector<1x128xf32> to vector<256x128xf32>
    %13 = arith.addf %11, %12 : vector<256x128xf32>
    %c0_10 = arith.constant 0 : index
    %c0_11 = arith.constant 0 : index
    %14 = vector.load %arg6[%c0_10, %c0_11] : memref<256x128xf32, #tpu.memory_space<vmem>>, vector<256x128xf32>
    tpu.vector_store %arg6[%c0_10, %c0_11], %13 {strides = array<i32>} : memref<256x128xf32, #tpu.memory_space<vmem>>, vector<256x128xf32>,
    return
  }
  func.func @transform_0(%arg0: i32) -> (i32, i32) {
    %c0_i32 = arith.constant 0 : i32
    %c0_i32_0 = arith.constant 0 : i32
    return %arg0, %c0_i32 : i32, i32
  }
  func.func @transform_1(%arg0: i32) -> (i32, i32) {
    %c0_i32 = arith.constant 0 : i32
    %c0_i32_0 = arith.constant 0 : i32
    %c0_i32_1 = arith.constant 0 : i32
    return %c0_i32, %c0_i32_0 : i32, i32
  }
  func.func @transform_2(%arg0: i32) -> (i32, i32) {
    %c0_i32 = arith.constant 0 : i32
    %c0_i32_0 = arith.constant 0 : i32
    %c0_i32_1 = arith.constant 0 : i32
    return %c0_i32, %c0_i32_0 : i32, i32
  }
  func.func @transform_3(%arg0: i32) -> (i32, i32) {
    %c0_i32 = arith.constant 0 : i32
    %c0_i32_0 = arith.constant 0 : i32
    %c0_i32_1 = arith.constant 0 : i32
    return %c0_i32, %c0_i32_0 : i32, i32
  }
  func.func @transform_4(%arg0: i32) -> (i32, i32) {
    %c0_i32 = arith.constant 0 : i32
    %c0_i32_0 = arith.constant 0 : i32
    %c0_i32_1 = arith.constant 0 : i32
    return %c0_i32, %c0_i32_0 : i32, i32
  }
  func.func @transform_5(%arg0: i32) -> (i32, i32) {
    %c0_i32 = arith.constant 0 : i32
    %c0_i32_0 = arith.constant 0 : i32
    return %arg0, %c0_i32 : i32, i32
  }
}

</mosaic_0001>

<llo_original>
// kernel: tpu_custom_call.1
$region0: #{tpu_custom_call.1}
  #allocation0 [shape = 'u32[]', space=smem, size = 0x4, offset = 0x4, fixed_abs, tag = 'smem constant byte address 0x4 - core index']
  #allocation1 [shape = 'u32[144,128]{1,0:T(1,128)}', space=vmem, size = 0x12000, scoped, tag = 'internal scratch']
  %s0 = inlined_call_operand.hbm [shape: f32[256,128], index: 0, kind: input, shape index: {}]
  %s1 = inlined_call_operand.hbm [shape: bf16[128,128], index: 1, kind: input, shape index: {}]
  %s2 = inlined_call_operand.vmem [shape: f32[1,128], index: 2, kind: input, shape index: {}]
  %s3 = inlined_call_operand.hbm [shape: bf16[128,128], index: 3, kind: input, shape index: {}]
  %s4 = inlined_call_operand.vmem [shape: f32[1,128], index: 4, kind: input, shape index: {}]
  %s5 = inlined_call_operand.hbm [shape: f32[256,128], index: 5, kind: output, shape index: {}]
  %s6 = sld [smem:[#allocation0]]
  $region42: #{tpu_custom_call.1} parent=0
    _
  %s8 = ssub.s32 1, %s6
  %s9 = scalar_select 0, %s8, %s6
  $region1: #{tpu_custom_call.1} parent=0
    #allocation2 [shape = 'u8[131072]{0}', space=vmem, size = 0x20000, scoped, tag = 'input window, operand 0, single buffered']
    #allocation3 [shape = 's32[1]{0}', space=sflag, size = 0x4, scoped, tag = 'scoped memory for tpu_custom_call.1']
    #allocation4 [shape = 's32[1]{0}', space=sflag, size = 0x4, scoped, tag = 'scoped memory for tpu_custom_call.1']
    #allocation5 [shape = 'u8[32768]{0}', space=vmem, size = 0x8000, scoped, tag = 'input window, operand 1, single buffered']
    #allocation6 [shape = 's32[1]{0}', space=sflag, size = 0x4, scoped, tag = 'scoped memory for tpu_custom_call.1']
    #allocation7 [shape = 'u8[32768]{0}', space=vmem, size = 0x8000, scoped, tag = 'input window, operand 3, single buffered']
    #allocation8 [shape = 'u8[131072]{0}', space=vmem, size = 0x20000, scoped, tag = 'output window, operand 0, single buffered']
    %10 = vsyncpa [#allocation3], 0
    %11 = vsyncpa [#allocation6], 0
    %12 = vsyncpa [#allocation4], 0
    // Predicated region
    $region2: #{tpu_custom_call.1} parent=1 // pred_check
      _
    $region3: #{tpu_custom_call.1} parent=1 // pred_check_branch
      %14 = sbr.rel (0) target = $region5
    $region4: #{tpu_custom_call.1} parent=1 // pred_region
      %s16 = ssub.s32 4096, 4096
      %17 = vsyncadd [#allocation3], %s16
      %s18 = sshll.u32 [#allocation2], 4
      %s19 = int_to_ptr.vmem [resolvable:$true] %s18
      %24 = dma.hbm_to_vmem [thread:$0]  %s0, 4096, %s19, [#allocation3], 128, 128, 8
    $region5: #{tpu_custom_call.1} parent=1 // pred_fallthru
      _
    // Predicated region
    $region6: #{tpu_custom_call.1} parent=1 // pred_check
      _
    $region7: #{tpu_custom_call.1} parent=1 // pred_check_branch
      %26 = sbr.rel (0) target = $region9
    $region8: #{tpu_custom_call.1} parent=1 // pred_region
      %s28 = ssub.s32 1024, 1024
      %29 = vsyncadd [#allocation6], %s28
      %s30 = sshll.u32 [#allocation5], 4
      %s31 = int_to_ptr.vmem [resolvable:$true] %s30
      %36 = dma.hbm_to_vmem [thread:$0]  %s1, 1024, %s31, [#allocation6], 64, 64, 4
    $region9: #{tpu_custom_call.1} parent=1 // pred_fallthru
      _
    // Predicated region
    $region10: #{tpu_custom_call.1} parent=1 // pred_check
      _
    $region11: #{tpu_custom_call.1} parent=1 // pred_check_branch
      %38 = sbr.rel (0) target = $region13
    $region12: #{tpu_custom_call.1} parent=1 // pred_region
      _
    $region13: #{tpu_custom_call.1} parent=1 // pred_fallthru
      _
    // Predicated region
    $region14: #{tpu_custom_call.1} parent=1 // pred_check
      _
    $region15: #{tpu_custom_call.1} parent=1 // pred_check_branch
      %40 = sbr.rel (0) target = $region17
    $region16: #{tpu_custom_call.1} parent=1 // pred_region
      %s42 = ssub.s32 1024, 1024
      %43 = vsyncadd [#allocation6], %s42
      %s44 = sshll.u32 [#allocation7], 4
      %s45 = int_to_ptr.vmem [resolvable:$true] %s44
      %50 = dma.hbm_to_vmem [thread:$0]  %s3, 1024, %s45, [#allocation6], 64, 64, 4
    $region17: #{tpu_custom_call.1} parent=1 // pred_fallthru
      _
    // Predicated region
    $region18: #{tpu_custom_call.1} parent=1 // pred_check
      _
    $region19: #{tpu_custom_call.1} parent=1 // pred_check_branch
      %52 = sbr.rel (0) target = $region21
    $region20: #{tpu_custom_call.1} parent=1 // pred_region
      _
    $region21: #{tpu_custom_call.1} parent=1 // pred_fallthru
      _
    // Predicated region
    $region22: #{tpu_custom_call.1} parent=1 // pred_check
      _
    $region23: #{tpu_custom_call.1} parent=1 // pred_check_branch
      %54 = sbr.rel (0) target = $region25
    $region24: #{tpu_custom_call.1} parent=1 // pred_region
      %55 = dma.done [#allocation3], 4096
    $region25: #{tpu_custom_call.1} parent=1 // pred_fallthru
      _
    // Predicated region
    $region26: #{tpu_custom_call.1} parent=1 // pred_check
      _
    $region27: #{tpu_custom_call.1} parent=1 // pred_check_branch
      %57 = sbr.rel (0) target = $region29
    $region28: #{tpu_custom_call.1} parent=1 // pred_region
      %58 = dma.done [#allocation6], 1024
    $region29: #{tpu_custom_call.1} parent=1 // pred_fallthru
      _
    // Predicated region
    $region30: #{tpu_custom_call.1} parent=1 // pred_check
      _
    $region31: #{tpu_custom_call.1} parent=1 // pred_check_branch
      %60 = sbr.rel (0) target = $region33
    $region32: #{tpu_custom_call.1} parent=1 // pred_region
      %61 = dma.done [#allocation6], 1024
    $region33: #{tpu_custom_call.1} parent=1 // pred_fallthru
      _
    %v63 = vld [vmem:[#allocation2] sm:$0xff]
    %v64 = vld [vmem:[#allocation2 + $0x8] sm:$0xff]
    %v65 = vld [vmem:[#allocation2 + $0x10] sm:$0xff]
    %v66 = vld [vmem:[#allocation2 + $0x18] sm:$0xff]
    %v67 = vld [vmem:[#allocation2 + $0x20] sm:$0xff]
    %v68 = vld [vmem:[#allocation2 + $0x28] sm:$0xff]
    %v69 = vld [vmem:[#allocation2 + $0x30] sm:$0xff]
    %v70 = vld [vmem:[#allocation2 + $0x38] sm:$0xff]
    %v71 = vld [vmem:[#allocation2 + $0x40] sm:$0xff]
    %v72 = vld [vmem:[#allocation2 + $0x48] sm:$0xff]
    %v73 = vld [vmem:[#allocation2 + $0x50] sm:$0xff]
    %v74 = vld [vmem:[#allocation2 + $0x58] sm:$0xff]
    %v75 = vld [vmem:[#allocation2 + $0x60] sm:$0xff]
    %v76 = vld [vmem:[#allocation2 + $0x68] sm:$0xff]
    %v77 = vld [vmem:[#allocation2 + $0x70] sm:$0xff]
    %v78 = vld [vmem:[#allocation2 + $0x78] sm:$0xff]
    %v79 = vld [vmem:[#allocation2 + $0x80] sm:$0xff]
    %v80 = vld [vmem:[#allocation2 + $0x88] sm:$0xff]
    %v81 = vld [vmem:[#allocation2 + $0x90] sm:$0xff]
    %v82 = vld [vmem:[#allocation2 + $0x98] sm:$0xff]
    %v83 = vld [vmem:[#allocation2 + $0xa0] sm:$0xff]
    %v84 = vld [vmem:[#allocation2 + $0xa8] sm:$0xff]
    %v85 = vld [vmem:[#allocation2 + $0xb0] sm:$0xff]
    %v86 = vld [vmem:[#allocation2 + $0xb8] sm:$0xff]
    %v87 = vld [vmem:[#allocation2 + $0xc0] sm:$0xff]
    %v88 = vld [vmem:[#allocation2 + $0xc8] sm:$0xff]
    %v89 = vld [vmem:[#allocation2 + $0xd0] sm:$0xff]
    %v90 = vld [vmem:[#allocation2 + $0xd8] sm:$0xff]
    %v91 = vld [vmem:[#allocation2 + $0xe0] sm:$0xff]
    %v92 = vld [vmem:[#allocation2 + $0xe8] sm:$0xff]
    %v93 = vld [vmem:[#allocation2 + $0xf0] sm:$0xff]
    %v94 = vld [vmem:[#allocation2 + $0xf8] sm:$0xff]
    %v95 = vld [vmem:[#allocation5] sm:$0xf]
    %v96 = vld [vmem:[#allocation5 + $0x4] sm:$0xf]
    %v97 = vld [vmem:[#allocation5 + $0x8] sm:$0xf]
    %v98 = vld [vmem:[#allocation5 + $0xc] sm:$0xf]
    %v99 = vld [vmem:[#allocation5 + $0x10] sm:$0xf]
    %v100 = vld [vmem:[#allocation5 + $0x14] sm:$0xf]
    %v101 = vld [vmem:[#allocation5 + $0x18] sm:$0xf]
    %v102 = vld [vmem:[#allocation5 + $0x1c] sm:$0xf]
    %v103 = vld [vmem:[#allocation5 + $0x20] sm:$0xf]
    %v104 = vld [vmem:[#allocation5 + $0x24] sm:$0xf]
    %v105 = vld [vmem:[#allocation5 + $0x28] sm:$0xf]
    %v106 = vld [vmem:[#allocation5 + $0x2c] sm:$0xf]
    %v107 = vld [vmem:[#allocation5 + $0x30] sm:$0xf]
    %v108 = vld [vmem:[#allocation5 + $0x34] sm:$0xf]
    %v109 = vld [vmem:[#allocation5 + $0x38] sm:$0xf]
    %v110 = vld [vmem:[#allocation5 + $0x3c] sm:$0xf]
    %v111 = vld [vmem:[%s2] sm:$0x1]
    %v112 = vld [vmem:[#allocation7] sm:$0xf]
    %v113 = vld [vmem:[#allocation7 + $0x4] sm:$0xf]
    %v114 = vld [vmem:[#allocation7 + $0x8] sm:$0xf]
    %v115 = vld [vmem:[#allocation7 + $0xc] sm:$0xf]
    %v116 = vld [vmem:[#allocation7 + $0x10] sm:$0xf]
    %v117 = vld [vmem:[#allocation7 + $0x14] sm:$0xf]
    %v118 = vld [vmem:[#allocation7 + $0x18] sm:$0xf]
    %v119 = vld [vmem:[#allocation7 + $0x1c] sm:$0xf]
    %v120 = vld [vmem:[#allocation7 + $0x20] sm:$0xf]
    %v121 = vld [vmem:[#allocation7 + $0x24] sm:$0xf]
    %v122 = vld [vmem:[#allocation7 + $0x28] sm:$0xf]
    %v123 = vld [vmem:[#allocation7 + $0x2c] sm:$0xf]
    %v124 = vld [vmem:[#allocation7 + $0x30] sm:$0xf]
    %v125 = vld [vmem:[#allocation7 + $0x34] sm:$0xf]
    %v126 = vld [vmem:[#allocation7 + $0x38] sm:$0xf]
    %v127 = vld [vmem:[#allocation7 + $0x3c] sm:$0xf]
    %v128 = vld [vmem:[%s4] sm:$0x1]
    %v129 = vpack.c.bf16 %v64, %v63
    %v130 = vpack.c.bf16 %v66, %v65
    %v131 = vpack.c.bf16 %v68, %v67
    %v132 = vpack.c.bf16 %v70, %v69
    %v133 = vpack.c.bf16 %v72, %v71
    %v134 = vpack.c.bf16 %v74, %v73
    %v135 = vpack.c.bf16 %v76, %v75
    %v136 = vpack.c.bf16 %v78, %v77
    %v137 = vpack.c.bf16 %v80, %v79
    %v138 = vpack.c.bf16 %v82, %v81
    %v139 = vpack.c.bf16 %v84, %v83
    %v140 = vpack.c.bf16 %v86, %v85
    %v141 = vpack.c.bf16 %v88, %v87
    %v142 = vpack.c.bf16 %v90, %v89
    %v143 = vpack.c.bf16 %v92, %v91
    %v144 = vpack.c.bf16 %v94, %v93
    %v146 = vlaneseq
    %v147 = vshrl.u32 %v146, 7
    %v148 = vsub.s32 0, %v147
    %v149 = vrot.slane %v111, %v148
    %v167 = vunpack.c.l.b16 %v95
    %v168 = vunpack.c.l.b16 %v96
    %v169 = vunpack.c.l.b16 %v97
    %v170 = vunpack.c.l.b16 %v98
    %v171 = vunpack.c.l.b16 %v99
    %v172 = vunpack.c.l.b16 %v100
    %v173 = vunpack.c.l.b16 %v101
    %v174 = vunpack.c.l.b16 %v102
    %v175 = vunpack.c.l.b16 %v103
    %v176 = vunpack.c.l.b16 %v104
    %v177 = vunpack.c.l.b16 %v105
    %v178 = vunpack.c.l.b16 %v106
    %v179 = vunpack.c.l.b16 %v107
    %v180 = vunpack.c.l.b16 %v108
    %v181 = vunpack.c.l.b16 %v109
    %v182 = vunpack.c.l.b16 %v110
    %v183 = vpack.c.b16 %v168, %v167
    %v184 = vpack.c.b16 %v170, %v169
    %v185 = vpack.c.b16 %v172, %v171
    %v186 = vpack.c.b16 %v174, %v173
    %v187 = vpack.c.b16 %v176, %v175
    %v188 = vpack.c.b16 %v178, %v177
    %v189 = vpack.c.b16 %v180, %v179
    %v190 = vpack.c.b16 %v182, %v181
    %199 = vmatprep.subr.bf16.mxu0 0
    %200 = vmatpush1.bf16.msra.mxu0 %v183
    %201 = vmatprep.subr.bf16.mxu0 0
    %202 = vmatpush1.bf16.msra.mxu0 %v184
    %203 = vmatprep.subr.bf16.mxu0 0
    %204 = vmatpush1.bf16.msra.mxu0 %v185
    %205 = vmatprep.subr.bf16.mxu0 0
    %206 = vmatpush1.bf16.msra.mxu0 %v186
    %207 = vmatprep.subr.bf16.mxu0 0
    %208 = vmatpush1.bf16.msra.mxu0 %v187
    %209 = vmatprep.subr.bf16.mxu0 0
    %210 = vmatpush1.bf16.msra.mxu0 %v188
    %211 = vmatprep.subr.bf16.mxu0 0
    %212 = vmatpush1.bf16.msra.mxu0 %v189
    %213 = vmatprep.subr.bf16.mxu0 0
    %214 = vmatpush1.bf16.msra.mxu0 %v190
    %215 = vmatprep.subr.bf16.mxu0 0
    %216 = vmatpush1.bf16.msra.mxu0 0
    %217 = vmatprep.subr.bf16.mxu0 0
    %218 = vmatpush1.bf16.msra.mxu0 0
    %219 = vmatprep.subr.bf16.mxu0 0
    %220 = vmatpush1.bf16.msra.mxu0 0
    %221 = vmatprep.subr.bf16.mxu0 0
    %222 = vmatpush1.bf16.msra.mxu0 0
    %223 = vmatprep.subr.bf16.mxu0 0
    %224 = vmatpush1.bf16.msra.mxu0 0
    %225 = vmatprep.subr.bf16.mxu0 0
    %226 = vmatpush1.bf16.msra.mxu0 0
    %227 = vmatprep.subr.bf16.mxu0 0
    %228 = vmatpush1.bf16.msra.mxu0 0
    %229 = vmatprep.subr.bf16.mxu0 0
    %230 = vmatpush1.bf16.msra.mxu0 0
    %231 = vmatprep.mubr.bf16.mxu0 0
    %232 = vmatmul.mubr.bf16.gmra.mrb[0].mxu0 %v129
    %v233 = vpop.f32.mrb[0].mxu0
    %v234 = vadd.f32 %v149, %v233
    %v235 = vpop.f32.mrb[0].mxu0
    %v236 = vpop.f32.mrb[0].mxu0
    %v237 = vadd.f32 %v149, %v236
    %v238 = vpop.f32.mrb[0].mxu0
    %239 = vmatprep.mubr.bf16.mxu0 0
    %240 = vmatmul.mubr.bf16.gmra.mrb[0].mxu0 %v130
    %v241 = vpop.f32.mrb[0].mxu0
    %v242 = vadd.f32 %v149, %v241
    %v243 = vpop.f32.mrb[0].mxu0
    %v244 = vpop.f32.mrb[0].mxu0
    %v245 = vadd.f32 %v149, %v244
    %v246 = vpop.f32.mrb[0].mxu0
    %247 = vmatprep.mubr.bf16.mxu0 0
    %248 = vmatmul.mubr.bf16.gmra.mrb[0].mxu0 %v131
    %v249 = vpop.f32.mrb[0].mxu0
    %v250 = vadd.f32 %v149, %v249
    %v251 = vpop.f32.mrb[0].mxu0
    %v252 = vpop.f32.mrb[0].mxu0
    %v253 = vadd.f32 %v149, %v252
    %v254 = vpop.f32.mrb[0].mxu0
    %255 = vmatprep.mubr.bf16.mxu0 0
    %256 = vmatmul.mubr.bf16.gmra.mrb[0].mxu0 %v132
    %v257 = vpop.f32.mrb[0].mxu0
    %v258 = vadd.f32 %v149, %v257
    %v259 = vpop.f32.mrb[0].mxu0
    %v260 = vpop.f32.mrb[0].mxu0
    %v261 = vadd.f32 %v149, %v260
    %v262 = vpop.f32.mrb[0].mxu0
    %263 = vmatprep.mubr.bf16.mxu0 0
    %264 = vmatmul.mubr.bf16.gmra.mrb[0].mxu0 %v133
    %v265 = vpop.f32.mrb[0].mxu0
    %v266 = vadd.f32 %v149, %v265
    %v267 = vpop.f32.mrb[0].mxu0
    %v268 = vpop.f32.mrb[0].mxu0
    %v269 = vadd.f32 %v149, %v268
    %v270 = vpop.f32.mrb[0].mxu0
    %271 = vmatprep.mubr.bf16.mxu0 0
    %272 = vmatmul.mubr.bf16.gmra.mrb[0].mxu0 %v134
    %v273 = vpop.f32.mrb[0].mxu0
    %v274 = vadd.f32 %v149, %v273
    %v275 = vpop.f32.mrb[0].mxu0
    %v276 = vpop.f32.mrb[0].mxu0
    %v277 = vadd.f32 %v149, %v276
    %v278 = vpop.f32.mrb[0].mxu0
    %279 = vmatprep.mubr.bf16.mxu0 0
    %280 = vmatmul.mubr.bf16.gmra.mrb[0].mxu0 %v135
    %v281 = vpop.f32.mrb[0].mxu0
    %v282 = vadd.f32 %v149, %v281
    %v283 = vpop.f32.mrb[0].mxu0
    %v284 = vpop.f32.mrb[0].mxu0
    %v285 = vadd.f32 %v149, %v284
    %v286 = vpop.f32.mrb[0].mxu0
    %287 = vmatprep.mubr.bf16.mxu0 0
    %288 = vmatmul.mubr.bf16.gmra.mrb[0].mxu0 %v136
    %v289 = vpop.f32.mrb[0].mxu0
    %v290 = vadd.f32 %v149, %v289
    %v291 = vpop.f32.mrb[0].mxu0
    %v292 = vpop.f32.mrb[0].mxu0
    %v293 = vadd.f32 %v149, %v292
    %v294 = vpop.f32.mrb[0].mxu0
    %295 = vmatprep.mubr.bf16.mxu0 0
    %296 = vmatmul.mubr.bf16.gmra.mrb[0].mxu0 %v137
    %v297 = vpop.f32.mrb[0].mxu0
    %v298 = vadd.f32 %v149, %v297
    %v299 = vpop.f32.mrb[0].mxu0
    %v300 = vpop.f32.mrb[0].mxu0
    %v301 = vadd.f32 %v149, %v300
    %v302 = vpop.f32.mrb[0].mxu0
    %303 = vmatprep.mubr.bf16.mxu0 0
    %304 = vmatmul.mubr.bf16.gmra.mrb[0].mxu0 %v138
    %v305 = vpop.f32.mrb[0].mxu0
    %v306 = vadd.f32 %v149, %v305
    %v307 = vpop.f32.mrb[0].mxu0
    %v308 = vpop.f32.mrb[0].mxu0
    %v309 = vadd.f32 %v149, %v308
    %v310 = vpop.f32.mrb[0].mxu0
    %311 = vmatprep.mubr.bf16.mxu0 0
    %312 = vmatmul.mubr.bf16.gmra.mrb[0].mxu0 %v139
    %v313 = vpop.f32.mrb[0].mxu0
    %v314 = vadd.f32 %v149, %v313
    %v315 = vpop.f32.mrb[0].mxu0
    %v316 = vpop.f32.mrb[0].mxu0
    %v317 = vadd.f32 %v149, %v316
    %v318 = vpop.f32.mrb[0].mxu0
    %319 = vmatprep.mubr.bf16.mxu0 0
    %320 = vmatmul.mubr.bf16.gmra.mrb[0].mxu0 %v140
    %v321 = vpop.f32.mrb[0].mxu0
    %v322 = vadd.f32 %v149, %v321
    %v323 = vpop.f32.mrb[0].mxu0
    %v324 = vpop.f32.mrb[0].mxu0
    %v325 = vadd.f32 %v149, %v324
    %v326 = vpop.f32.mrb[0].mxu0
    %327 = vmatprep.mubr.bf16.mxu0 0
    %328 = vmatmul.mubr.bf16.gmra.mrb[0].mxu0 %v141
    %v329 = vpop.f32.mrb[0].mxu0
    %v330 = vadd.f32 %v149, %v329
    %v331 = vpop.f32.mrb[0].mxu0
    %v332 = vpop.f32.mrb[0].mxu0
    %v333 = vadd.f32 %v149, %v332
    %v334 = vpop.f32.mrb[0].mxu0
    %335 = vmatprep.mubr.bf16.mxu0 0
    %336 = vmatmul.mubr.bf16.gmra.mrb[0].mxu0 %v142
    %v337 = vpop.f32.mrb[0].mxu0
    %v338 = vadd.f32 %v149, %v337
    %v339 = vpop.f32.mrb[0].mxu0
    %v340 = vpop.f32.mrb[0].mxu0
    %v341 = vadd.f32 %v149, %v340
    %v342 = vpop.f32.mrb[0].mxu0
    %343 = vmatprep.mubr.bf16.mxu0 0
    %344 = vmatmul.mubr.bf16.gmra.mrb[0].mxu0 %v143
    %v345 = vpop.f32.mrb[0].mxu0
    %v346 = vadd.f32 %v149, %v345
    %v347 = vpop.f32.mrb[0].mxu0
    %v348 = vpop.f32.mrb[0].mxu0
    %v349 = vadd.f32 %v149, %v348
    %v350 = vpop.f32.mrb[0].mxu0
    %351 = vmatprep.mubr.bf16.mxu0 0
    %352 = vmatmul.mubr.bf16.gmra.mrb[0].mxu0 %v144
    %v353 = vpop.f32.mrb[0].mxu0
    %v354 = vadd.f32 %v149, %v353
    %v355 = vpop.f32.mrb[0].mxu0
    %v356 = vpop.f32.mrb[0].mxu0
    %v357 = vadd.f32 %v149, %v356
    %v358 = vpop.f32.mrb[0].mxu0
    %359 = vdwg.mxu0
    %v360 = vtanh.pop %v234
    %v361 = vtanh.pop %v237
    %v362 = vtanh.pop %v242
    %v363 = vtanh.pop %v245
    %v364 = vtanh.pop %v250
    %v365 = vtanh.pop %v253
    %v366 = vtanh.pop %v258
    %v367 = vtanh.pop %v261
    %v368 = vtanh.pop %v266
    %v369 = vtanh.pop %v269
    %v370 = vtanh.pop %v274
    %v371 = vtanh.pop %v277
    %v372 = vtanh.pop %v282
    %v373 = vtanh.pop %v285
    %v374 = vtanh.pop %v290
    %v375 = vtanh.pop %v293
    %v376 = vtanh.pop %v298
    %v377 = vtanh.pop %v301
    %v378 = vtanh.pop %v306
    %v379 = vtanh.pop %v309
    %v380 = vtanh.pop %v314
    %v381 = vtanh.pop %v317
    %v382 = vtanh.pop %v322
    %v383 = vtanh.pop %v325
    %v384 = vtanh.pop %v330
    %v385 = vtanh.pop %v333
    %v386 = vtanh.pop %v338
    %v387 = vtanh.pop %v341
    %v388 = vtanh.pop %v346
    %v389 = vtanh.pop %v349
    %v390 = vtanh.pop %v354
    %v391 = vtanh.pop %v357
    %v392 = vpack.c.bf16 %v361, %v360
    %v393 = vpack.c.bf16 %v363, %v362
    %v394 = vpack.c.bf16 %v365, %v364
    %v395 = vpack.c.bf16 %v367, %v366
    %v396 = vpack.c.bf16 %v369, %v368
    %v397 = vpack.c.bf16 %v371, %v370
    %v398 = vpack.c.bf16 %v373, %v372
    %v399 = vpack.c.bf16 %v375, %v374
    %v400 = vpack.c.bf16 %v377, %v376
    %v401 = vpack.c.bf16 %v379, %v378
    %v402 = vpack.c.bf16 %v381, %v380
    %v403 = vpack.c.bf16 %v383, %v382
    %v404 = vpack.c.bf16 %v385, %v384
    %v405 = vpack.c.bf16 %v387, %v386
    %v406 = vpack.c.bf16 %v389, %v388
    %v407 = vpack.c.bf16 %v391, %v390
    %v409 = vlaneseq
    %v410 = vshrl.u32 %v409, 7
    %v411 = vsub.s32 0, %v410
    %v412 = vrot.slane %v128, %v411
    %v430 = vunpack.c.l.b16 %v112
    %v431 = vunpack.c.l.b16 %v113
    %v432 = vunpack.c.l.b16 %v114
    %v433 = vunpack.c.l.b16 %v115
    %v434 = vunpack.c.l.b16 %v116
    %v435 = vunpack.c.l.b16 %v117
    %v436 = vunpack.c.l.b16 %v118
    %v437 = vunpack.c.l.b16 %v119
    %v438 = vunpack.c.l.b16 %v120
    %v439 = vunpack.c.l.b16 %v121
    %v440 = vunpack.c.l.b16 %v122
    %v441 = vunpack.c.l.b16 %v123
    %v442 = vunpack.c.l.b16 %v124
    %v443 = vunpack.c.l.b16 %v125
    %v444 = vunpack.c.l.b16 %v126
    %v445 = vunpack.c.l.b16 %v127
    %v446 = vpack.c.b16 %v431, %v430
    %v447 = vpack.c.b16 %v433, %v432
    %v448 = vpack.c.b16 %v435, %v434
    %v449 = vpack.c.b16 %v437, %v436
    %v450 = vpack.c.b16 %v439, %v438
    %v451 = vpack.c.b16 %v441, %v440
    %v452 = vpack.c.b16 %v443, %v442
    %v453 = vpack.c.b16 %v445, %v444
    %462 = vmatprep.subr.bf16.mxu0 0
    %463 = vmatpush1.bf16.msra.mxu0 %v446
    %464 = vmatprep.subr.bf16.mxu0 0
    %465 = vmatpush1.bf16.msra.mxu0 %v447
    %466 = vmatprep.subr.bf16.mxu0 0
    %467 = vmatpush1.bf16.msra.mxu0 %v448
    %468 = vmatprep.subr.bf16.mxu0 0
    %469 = vmatpush1.bf16.msra.mxu0 %v449
    %470 = vmatprep.subr.bf16.mxu0 0
    %471 = vmatpush1.bf16.msra.mxu0 %v450
    %472 = vmatprep.subr.bf16.mxu0 0
    %473 = vmatpush1.bf16.msra.mxu0 %v451
    %474 = vmatprep.subr.bf16.mxu0 0
    %475 = vmatpush1.bf16.msra.mxu0 %v452
    %476 = vmatprep.subr.bf16.mxu0 0
    %477 = vmatpush1.bf16.msra.mxu0 %v453
    %478 = vmatprep.subr.bf16.mxu0 0
    %479 = vmatpush1.bf16.msra.mxu0 0
    %480 = vmatprep.subr.bf16.mxu0 0
    %481 = vmatpush1.bf16.msra.mxu0 0
    %482 = vmatprep.subr.bf16.mxu0 0
    %483 = vmatpush1.bf16.msra.mxu0 0
    %484 = vmatprep.subr.bf16.mxu0 0
    %485 = vmatpush1.bf16.msra.mxu0 0
    %486 = vmatprep.subr.bf16.mxu0 0
    %487 = vmatpush1.bf16.msra.mxu0 0
    %488 = vmatprep.subr.bf16.mxu0 0
    %489 = vmatpush1.bf16.msra.mxu0 0
    %490 = vmatprep.subr.bf16.mxu0 0
    %491 = vmatpush1.bf16.msra.mxu0 0
    %492 = vmatprep.subr.bf16.mxu0 0
    %493 = vmatpush1.bf16.msra.mxu0 0
    %494 = vmatprep.mubr.bf16.mxu0 0
    %495 = vmatmul.mubr.bf16.gmra.mrb[0].mxu0 %v392
    %v496 = vpop.f32.mrb[0].mxu0
    %v497 = vadd.f32 %v412, %v496
    %v498 = vpop.f32.mrb[0].mxu0
    %v499 = vpop.f32.mrb[0].mxu0
    %v500 = vadd.f32 %v412, %v499
    %v501 = vpop.f32.mrb[0].mxu0
    %502 = vmatprep.mubr.bf16.mxu0 0
    %503 = vmatmul.mubr.bf16.gmra.mrb[0].mxu0 %v393
    %v504 = vpop.f32.mrb[0].mxu0
    %v505 = vadd.f32 %v412, %v504
    %v506 = vpop.f32.mrb[0].mxu0
    %v507 = vpop.f32.mrb[0].mxu0
    %v508 = vadd.f32 %v412, %v507
    %v509 = vpop.f32.mrb[0].mxu0
    %510 = vmatprep.mubr.bf16.mxu0 0
    %511 = vmatmul.mubr.bf16.gmra.mrb[0].mxu0 %v394
    %v512 = vpop.f32.mrb[0].mxu0
    %v513 = vadd.f32 %v412, %v512
    %v514 = vpop.f32.mrb[0].mxu0
    %v515 = vpop.f32.mrb[0].mxu0
    %v516 = vadd.f32 %v412, %v515
    %v517 = vpop.f32.mrb[0].mxu0
    %518 = vmatprep.mubr.bf16.mxu0 0
    %519 = vmatmul.mubr.bf16.gmra.mrb[0].mxu0 %v395
    %v520 = vpop.f32.mrb[0].mxu0
    %v521 = vadd.f32 %v412, %v520
    %v522 = vpop.f32.mrb[0].mxu0
    %v523 = vpop.f32.mrb[0].mxu0
    %v524 = vadd.f32 %v412, %v523
    %v525 = vpop.f32.mrb[0].mxu0
    %526 = vmatprep.mubr.bf16.mxu0 0
    %527 = vmatmul.mubr.bf16.gmra.mrb[0].mxu0 %v396
    %v528 = vpop.f32.mrb[0].mxu0
    %v529 = vadd.f32 %v412, %v528
    %v530 = vpop.f32.mrb[0].mxu0
    %v531 = vpop.f32.mrb[0].mxu0
    %v532 = vadd.f32 %v412, %v531
    %v533 = vpop.f32.mrb[0].mxu0
    %534 = vmatprep.mubr.bf16.mxu0 0
    %535 = vmatmul.mubr.bf16.gmra.mrb[0].mxu0 %v397
    %v536 = vpop.f32.mrb[0].mxu0
    %v537 = vadd.f32 %v412, %v536
    %v538 = vpop.f32.mrb[0].mxu0
    %v539 = vpop.f32.mrb[0].mxu0
    %v540 = vadd.f32 %v412, %v539
    %v541 = vpop.f32.mrb[0].mxu0
    %542 = vmatprep.mubr.bf16.mxu0 0
    %543 = vmatmul.mubr.bf16.gmra.mrb[0].mxu0 %v398
    %v544 = vpop.f32.mrb[0].mxu0
    %v545 = vadd.f32 %v412, %v544
    %v546 = vpop.f32.mrb[0].mxu0
    %v547 = vpop.f32.mrb[0].mxu0
    %v548 = vadd.f32 %v412, %v547
    %v549 = vpop.f32.mrb[0].mxu0
    %550 = vmatprep.mubr.bf16.mxu0 0
    %551 = vmatmul.mubr.bf16.gmra.mrb[0].mxu0 %v399
    %v552 = vpop.f32.mrb[0].mxu0
    %v553 = vadd.f32 %v412, %v552
    %v554 = vpop.f32.mrb[0].mxu0
    %v555 = vpop.f32.mrb[0].mxu0
    %v556 = vadd.f32 %v412, %v555
    %v557 = vpop.f32.mrb[0].mxu0
    %558 = vmatprep.mubr.bf16.mxu0 0
    %559 = vmatmul.mubr.bf16.gmra.mrb[0].mxu0 %v400
    %v560 = vpop.f32.mrb[0].mxu0
    %v561 = vadd.f32 %v412, %v560
    %v562 = vpop.f32.mrb[0].mxu0
    %v563 = vpop.f32.mrb[0].mxu0
    %v564 = vadd.f32 %v412, %v563
    %v565 = vpop.f32.mrb[0].mxu0
    %566 = vmatprep.mubr.bf16.mxu0 0
    %567 = vmatmul.mubr.bf16.gmra.mrb[0].mxu0 %v401
    %v568 = vpop.f32.mrb[0].mxu0
    %v569 = vadd.f32 %v412, %v568
    %v570 = vpop.f32.mrb[0].mxu0
    %v571 = vpop.f32.mrb[0].mxu0
    %v572 = vadd.f32 %v412, %v571
    %v573 = vpop.f32.mrb[0].mxu0
    %574 = vmatprep.mubr.bf16.mxu0 0
    %575 = vmatmul.mubr.bf16.gmra.mrb[0].mxu0 %v402
    %v576 = vpop.f32.mrb[0].mxu0
    %v577 = vadd.f32 %v412, %v576
    %v578 = vpop.f32.mrb[0].mxu0
    %v579 = vpop.f32.mrb[0].mxu0
    %v580 = vadd.f32 %v412, %v579
    %v581 = vpop.f32.mrb[0].mxu0
    %582 = vmatprep.mubr.bf16.mxu0 0
    %583 = vmatmul.mubr.bf16.gmra.mrb[0].mxu0 %v403
    %v584 = vpop.f32.mrb[0].mxu0
    %v585 = vadd.f32 %v412, %v584
    %v586 = vpop.f32.mrb[0].mxu0
    %v587 = vpop.f32.mrb[0].mxu0
    %v588 = vadd.f32 %v412, %v587
    %v589 = vpop.f32.mrb[0].mxu0
    %590 = vmatprep.mubr.bf16.mxu0 0
    %591 = vmatmul.mubr.bf16.gmra.mrb[0].mxu0 %v404
    %v592 = vpop.f32.mrb[0].mxu0
    %v593 = vadd.f32 %v412, %v592
    %v594 = vpop.f32.mrb[0].mxu0
    %v595 = vpop.f32.mrb[0].mxu0
    %v596 = vadd.f32 %v412, %v595
    %v597 = vpop.f32.mrb[0].mxu0
    %598 = vmatprep.mubr.bf16.mxu0 0
    %599 = vmatmul.mubr.bf16.gmra.mrb[0].mxu0 %v405
    %v600 = vpop.f32.mrb[0].mxu0
    %v601 = vadd.f32 %v412, %v600
    %v602 = vpop.f32.mrb[0].mxu0
    %v603 = vpop.f32.mrb[0].mxu0
    %v604 = vadd.f32 %v412, %v603
    %v605 = vpop.f32.mrb[0].mxu0
    %606 = vmatprep.mubr.bf16.mxu0 0
    %607 = vmatmul.mubr.bf16.gmra.mrb[0].mxu0 %v406
    %v608 = vpop.f32.mrb[0].mxu0
    %v609 = vadd.f32 %v412, %v608
    %v610 = vpop.f32.mrb[0].mxu0
    %v611 = vpop.f32.mrb[0].mxu0
    %v612 = vadd.f32 %v412, %v611
    %v613 = vpop.f32.mrb[0].mxu0
    %614 = vmatprep.mubr.bf16.mxu0 0
    %615 = vmatmul.mubr.bf16.gmra.mrb[0].mxu0 %v407
    %v616 = vpop.f32.mrb[0].mxu0
    %v617 = vadd.f32 %v412, %v616
    %v618 = vpop.f32.mrb[0].mxu0
    %v619 = vpop.f32.mrb[0].mxu0
    %v620 = vadd.f32 %v412, %v619
    %v621 = vpop.f32.mrb[0].mxu0
    %622 = vdwg.mxu0
    %623 = vst [vmem:[#allocation8] sm:$0xff] %v497
    %624 = vst [vmem:[#allocation8 + $0x8] sm:$0xff] %v500
    %625 = vst [vmem:[#allocation8 + $0x10] sm:$0xff] %v505
    %626 = vst [vmem:[#allocation8 + $0x18] sm:$0xff] %v508
    %627 = vst [vmem:[#allocation8 + $0x20] sm:$0xff] %v513
    %628 = vst [vmem:[#allocation8 + $0x28] sm:$0xff] %v516
    %629 = vst [vmem:[#allocation8 + $0x30] sm:$0xff] %v521
    %630 = vst [vmem:[#allocation8 + $0x38] sm:$0xff] %v524
    %631 = vst [vmem:[#allocation8 + $0x40] sm:$0xff] %v529
    %632 = vst [vmem:[#allocation8 + $0x48] sm:$0xff] %v532
    %633 = vst [vmem:[#allocation8 + $0x50] sm:$0xff] %v537
    %634 = vst [vmem:[#allocation8 + $0x58] sm:$0xff] %v540
    %635 = vst [vmem:[#allocation8 + $0x60] sm:$0xff] %v545
    %636 = vst [vmem:[#allocation8 + $0x68] sm:$0xff] %v548
    %637 = vst [vmem:[#allocation8 + $0x70] sm:$0xff] %v553
    %638 = vst [vmem:[#allocation8 + $0x78] sm:$0xff] %v556
    %639 = vst [vmem:[#allocation8 + $0x80] sm:$0xff] %v561
    %640 = vst [vmem:[#allocation8 + $0x88] sm:$0xff] %v564
    %641 = vst [vmem:[#allocation8 + $0x90] sm:$0xff] %v569
    %642 = vst [vmem:[#allocation8 + $0x98] sm:$0xff] %v572
    %643 = vst [vmem:[#allocation8 + $0xa0] sm:$0xff] %v577
    %644 = vst [vmem:[#allocation8 + $0xa8] sm:$0xff] %v580
    %645 = vst [vmem:[#allocation8 + $0xb0] sm:$0xff] %v585
    %646 = vst [vmem:[#allocation8 + $0xb8] sm:$0xff] %v588
    %647 = vst [vmem:[#allocation8 + $0xc0] sm:$0xff] %v593
    %648 = vst [vmem:[#allocation8 + $0xc8] sm:$0xff] %v596
    %649 = vst [vmem:[#allocation8 + $0xd0] sm:$0xff] %v601
    %650 = vst [vmem:[#allocation8 + $0xd8] sm:$0xff] %v604
    %651 = vst [vmem:[#allocation8 + $0xe0] sm:$0xff] %v609
    %652 = vst [vmem:[#allocation8 + $0xe8] sm:$0xff] %v612
    %653 = vst [vmem:[#allocation8 + $0xf0] sm:$0xff] %v617
    %654 = vst [vmem:[#allocation8 + $0xf8] sm:$0xff] %v620
    // Predicated region
    $region34: #{tpu_custom_call.1} parent=1 // pred_check
      _
    $region35: #{tpu_custom_call.1} parent=1 // pred_check_branch
      %656 = sbr.rel (0) target = $region37
    $region36: #{tpu_custom_call.1} parent=1 // pred_region
      %s658 = ssub.s32 4096, 4096
      %659 = vsyncadd [#allocation4], %s658
      %s660 = sshll.u32 [#allocation8], 4
      %s661 = int_to_ptr.vmem [resolvable:$true] %s660
      %666 = dma.vmem_to_hbm [thread:$0]  %s661, 4096, %s5, [#allocation4], 128, 128, 8
    $region37: #{tpu_custom_call.1} parent=1 // pred_fallthru
      _
    // Predicated region
    $region38: #{tpu_custom_call.1} parent=1 // pred_check
      _
    $region39: #{tpu_custom_call.1} parent=1 // pred_check_branch
      %668 = sbr.rel (0) target = $region41
    $region40: #{tpu_custom_call.1} parent=1 // pred_region
      %669 = dma.done [#allocation4], 4096
    $region41: #{tpu_custom_call.1} parent=1 // pred_fallthru
      _
    %670 = vsyncpa [#allocation3], 1
    %671 = vsyncpa [#allocation6], 1
    %672 = vsyncpa [#allocation4], 1

</llo_original>
